<compile_context>
chip_gen: v6e
topology: v6e:2x2x1
jax: 0.10.0
libtpu: 0.0.40
codegen_flags: <defaults>
</compile_context>

<pallas_src>
import functools

import jax
import jax.numpy as jnp
from jax.experimental import pallas as pl
from jax.experimental.pallas import tpu as pltpu

EPS = 1e-6
LANES = 128
SUBLANES = 8
_MAX_BLOCK_ROWS = 8192          # 4 MiB / tile (f32);  2 inputs x 2 buffers = 16 MiB
_VMEM_LIMIT_BYTES = 48 << 20    # under v7x's 64 MiB/TC, plenty on v5e/v6e


def _round_up(a, b):
    return ((a + b - 1) // b) * b


def _charbonnier_kernel(x_ref, y_ref, o_ref, *,
                        rows, block_rows, blocks_per_part, n_blocks, eps):
    p = pl.program_id(0)            # partition (TensorCore) axis — "parallel"
    i = pl.program_id(1)            # row-block sweep within a partition — "arbitrary"
    blk = p * blocks_per_part + i   # logical row-block index

    @pl.when(i == 0)
    def _():
        o_ref[...] = jnp.zeros_like(o_ref)

    @pl.when(blk < n_blocks)        # skip clamped overshoot blocks entirely
    def _():
        x = x_ref[...].astype(jnp.float32)
        y = y_ref[...].astype(jnp.float32)
        d = x - y
        err = jnp.sqrt(d * d + eps)

        def accumulate(e):
            # Fold the (block_rows, 128) tile into the resident (8, 128) output
            # block with pure VPU adds; o_ref stays in VMEM across the whole
            # `i` sweep (same output block index), so HBM writeback happens
            # once per partition.
            o_ref[...] += e.reshape(block_rows // SUBLANES, SUBLANES, LANES).sum(axis=0)

        if rows % block_rows != 0:
            # Only the final row block can be ragged; every other step takes
            # the unmasked fast path (no iota / compare / select per step).
            @pl.when(blk == n_blocks - 1)
            def _():
                rid = jax.lax.broadcasted_iota(jnp.int32, err.shape, 0)
                accumulate(jnp.where(blk * block_rows + rid < rows, err, 0.0))

            @pl.when(blk != n_blocks - 1)
            def _():
                accumulate(err)
        else:
            accumulate(err)


def _tpu_kind():
    """Best-effort TPU generation string ('' if undetectable)."""
    try:
        info = pltpu.get_tpu_info()
        name = str(getattr(info, "chip_version", "") or "")
        if name:
            return name.lower()
    except Exception:
        pass
    try:
        return jax.devices()[0].device_kind.lower()
    except Exception:
        return ""


def _default_num_parts():
    # v7x has two TensorCores per chip: shard the row sweep across them via the
    # leading "parallel" grid axis.  v5e / v6e have a single TC, where the axis
    # would just be a serial outer loop -> keep it at 1 there.
    return 2 if "7" in _tpu_kind() else 1


def charbonnier_loss(x, y, *, block_rows=_MAX_BLOCK_ROWS, num_parts=None):
    """Pallas implementation of CharbonnierLoss.forward(X, Y) -> scalar f32."""
    assert x.shape == y.shape, "X and Y must have the same shape"
    total = x.size
    if total == 0:
        raise ValueError("CharbonnierLoss of an empty tensor is undefined")
    itemsize = jnp.dtype(x.dtype).itemsize
    if num_parts is None:
        num_parts = _default_num_parts()

    flat_x = x.reshape(-1)
    flat_y = y.reshape(-1)

    # Pad the flat length to a multiple of 8*128 so the (rows, 128) slab always
    # has a sublane-aligned row count and row-block tiling never overshoots the
    # array for tiny inputs.  Padded positions are zero in BOTH x and y, so each
    # contributes exactly sqrt(eps), removed analytically below — no per-element
    # mask in the kernel.  Typical image tensors (multiples of 1024 elements)
    # take this zero-copy path; the layout-preserving reshape below is free.
    chunk = SUBLANES * LANES
    padded = _round_up(total, chunk)
    pad = padded - total
    if pad:
        flat_x = jnp.pad(flat_x, (0, pad))
        flat_y = jnp.pad(flat_y, (0, pad))

    rows = padded // LANES
    x2 = flat_x.reshape(rows, LANES)
    y2 = flat_y.reshape(rows, LANES)

    # Large streaming tiles; rows is a multiple of 8, so block_rows always is too.
    block_rows = min(_round_up(block_rows, SUBLANES), rows)

    n_blocks = pl.cdiv(rows, block_rows)
    num_parts = max(1, min(num_parts, n_blocks))
    blocks_per_part = pl.cdiv(n_blocks, num_parts)

    def in_map(p, i):
        # Clamp so DMAs never target a fully out-of-range block; the kernel
        # skips accumulation for those via `blk < n_blocks`.
        return (jnp.minimum(p * blocks_per_part + i, n_blocks - 1), 0)

    kernel = functools.partial(
        _charbonnier_kernel,
        rows=rows,
        block_rows=block_rows,
        blocks_per_part=blocks_per_part,
        n_blocks=n_blocks,
        eps=EPS,
    )

    partials = pl.pallas_call(
        kernel,
        out_shape=jax.ShapeDtypeStruct((num_parts * SUBLANES, LANES), jnp.float32),
        grid_spec=pltpu.PrefetchScalarGridSpec(
            num_scalar_prefetch=0,
            grid=(num_parts, blocks_per_part),
            in_specs=[
                pl.BlockSpec((block_rows, LANES), in_map),
                pl.BlockSpec((block_rows, LANES), in_map),
            ],
            out_specs=pl.BlockSpec((SUBLANES, LANES), lambda p, i: (p, 0)),
        ),
        compiler_params=pltpu.CompilerParams(
            dimension_semantics=("parallel", "arbitrary"),
            vmem_limit_bytes=_VMEM_LIMIT_BYTES,
        ),
        cost_estimate=pl.CostEstimate(
            flops=4 * padded,
            transcendentals=padded,
            bytes_accessed=2 * padded * itemsize + num_parts * SUBLANES * LANES * 4,
        ),
    )(x2, y2)

    sqrt_eps = jnp.sqrt(jnp.float32(EPS))
    return (jnp.sum(partials) - jnp.float32(pad) * sqrt_eps) / jnp.float32(total)


def charbonnier_loss_ref(x, y):
    d = x.astype(jnp.float32) - y.astype(jnp.float32)
    return jnp.mean(jnp.sqrt(d * d + EPS))


if __name__ == "__main__":
    key = jax.random.PRNGKey(0)
    kx, ky = jax.random.split(key)
    # NCHW-shaped inputs like the PyTorch use case (batch=2, channels=4, 16x16).
    X = jax.random.normal(kx, (2, 4, 16, 16), dtype=jnp.float32)
    Y = jax.random.normal(ky, (2, 4, 16, 16), dtype=jnp.float32)
    loss = jax.block_until_ready(charbonnier_loss(X, Y))
    ref = jax.block_until_ready(charbonnier_loss_ref(X, Y))
    assert jnp.allclose(loss, ref, rtol=1e-5, atol=1e-5), (loss, ref)

    # Ragged element count (not a multiple of 1024): exercises the zero-pad +
    # wrapper-side sqrt(eps) correction path.
    kx2, ky2 = jax.random.split(ky)
    X2 = jax.random.normal(kx2, (3, 5, 7), dtype=jnp.float32)
    Y2 = jax.random.normal(ky2, (3, 5, 7), dtype=jnp.float32)
    loss2 = jax.block_until_ready(charbonnier_loss(X2, Y2))
    ref2 = jax.block_until_ready(charbonnier_loss_ref(X2, Y2))
    assert jnp.allclose(loss2, ref2, rtol=1e-5, atol=1e-5), (loss2, ref2)

    # Small block_rows + 2 partitions: exercises the last-block row mask and the
    # clamped-overshoot skip path (rows=40, block_rows=16, n_blocks=3, parts=2).
    kx3, ky3 = jax.random.split(kx2)
    X3 = jax.random.normal(kx3, (5, 8, 128), dtype=jnp.float32)
    Y3 = jax.random.normal(ky3, (5, 8, 128), dtype=jnp.float32)
    loss3 = jax.block_until_ready(charbonnier_loss(X3, Y3, block_rows=16, num_parts=2))
    ref3 = jax.block_until_ready(charbonnier_loss_ref(X3, Y3))
    assert jnp.allclose(loss3, ref3, rtol=1e-5, atol=1e-5), (loss3, ref3)

    print("KERNEL_OK")
</pallas_src>

<mosaic_0001>
module attributes {stable_mosaic.version = 11 : i64} {
  func.func @_charbonnier_kernel(%arg0: i32, %arg1: i32, %arg2: memref<16x128xf32, #tpu.memory_space<vmem>>, %arg3: memref<16x128xf32, #tpu.memory_space<vmem>>, %arg4: memref<8x128xf32, #tpu.memory_space<vmem>>) attributes {dimension_semantics = [#tpu.dimension_semantics<parallel>, #tpu.dimension_semantics<arbitrary>], iteration_bounds = array<i64: 1, 1>, scalar_prefetch = 0 : i64, scratch_operands = 0 : i64, tpu.core_type = #tpu.core_type<tc>, window_params = [{transform_indices = @transform_0, window_bounds = array<i64: 16, 128>}, {transform_indices = @transform_1, window_bounds = array<i64: 16, 128>}, {transform_indices = @transform_2, window_bounds = array<i64: 8, 128>}]} {
    %c1_i32 = arith.constant 1 : i32
    %0 = arith.muli %arg0, %c1_i32 : i32
    %1 = arith.addi %0, %arg1 : i32
    %c0_i32 = arith.constant 0 : i32
    %2 = arith.cmpi eq, %arg1, %c0_i32 : i32
    %3 = arith.extui %2 : i1 to i32
    %c0_i32_0 = arith.constant 0 : i32
    %4 = arith.cmpi ne, %3, %c0_i32_0 : i32
    scf.if %4 {
      %cst = arith.constant 0.000000e+00 : f32
      %8 = vector.broadcast %cst : f32 to vector<8x128xf32>
      %c0 = arith.constant 0 : index
      %c0_3 = arith.constant 0 : index
      %9 = vector.load %arg4[%c0, %c0_3] : memref<8x128xf32, #tpu.memory_space<vmem>>, vector<8x128xf32>
      tpu.vector_store %arg4[%c0, %c0_3], %8 {strides = array<i32>} : memref<8x128xf32, #tpu.memory_space<vmem>>, vector<8x128xf32>,
    } else {
    }
    %c1_i32_1 = arith.constant 1 : i32
    %5 = arith.cmpi slt, %1, %c1_i32_1 : i32
    %6 = arith.extui %5 : i1 to i32
    %c0_i32_2 = arith.constant 0 : i32
    %7 = arith.cmpi ne, %6, %c0_i32_2 : i32
    scf.if %7 {
      %c0 = arith.constant 0 : index
      %c0_3 = arith.constant 0 : index
      %8 = vector.load %arg2[%c0, %c0_3] : memref<16x128xf32, #tpu.memory_space<vmem>>, vector<16x128xf32>
      %c0_4 = arith.constant 0 : index
      %c0_5 = arith.constant 0 : index
      %9 = vector.load %arg3[%c0_4, %c0_5] : memref<16x128xf32, #tpu.memory_space<vmem>>, vector<16x128xf32>
      %10 = arith.subf %8, %9 : vector<16x128xf32>
      %11 = arith.mulf %10, %10 : vector<16x128xf32>
      %cst = arith.constant 9.99999997E-7 : f32
      %12 = vector.broadcast %cst : f32 to vector<16x128xf32>
      %13 = arith.addf %11, %12 : vector<16x128xf32>
      %14 = math.sqrt %13 : vector<16x128xf32>
      %c0_6 = arith.constant 0 : index
      %c0_7 = arith.constant 0 : index
      %15 = vector.load %arg4[%c0_6, %c0_7] : memref<8x128xf32, #tpu.memory_space<vmem>>, vector<8x128xf32>
      %16 = vector.shape_cast %14 : vector<16x128xf32> to vector<2x8x128xf32>
      %cst_8 = arith.constant dense<0.000000e+00> : vector<8x128xf32>
      %17 = vector.multi_reduction <add>, %16, %cst_8 [0] : vector<2x8x128xf32> to vector<8x128xf32>
      %18 = arith.addf %15, %17 : vector<8x128xf32>
      %c0_9 = arith.constant 0 : index
      %c0_10 = arith.constant 0 : index
      %19 = vector.load %arg4[%c0_9, %c0_10] : memref<8x128xf32, #tpu.memory_space<vmem>>, vector<8x128xf32>
      tpu.vector_store %arg4[%c0_9, %c0_10], %18 {strides = array<i32>} : memref<8x128xf32, #tpu.memory_space<vmem>>, vector<8x128xf32>,
    } else {
    }
    return
  }
  func.func @transform_0(%arg0: i32, %arg1: i32) -> (i32, i32) {
    %c1_i32 = arith.constant 1 : i32
    %0 = arith.muli %arg0, %c1_i32 : i32
    %1 = arith.addi %0, %arg1 : i32
    %c0_i32 = arith.constant 0 : i32
    %2 = arith.minsi %1, %c0_i32 : i32
    %c0_i32_0 = arith.constant 0 : i32
    %c0_i32_1 = arith.constant 0 : i32
    return %2, %c0_i32_0 : i32, i32
  }
  func.func @transform_1(%arg0: i32, %arg1: i32) -> (i32, i32) {
    %c1_i32 = arith.constant 1 : i32
    %0 = arith.muli %arg0, %c1_i32 : i32
    %1 = arith.addi %0, %arg1 : i32
    %c0_i32 = arith.constant 0 : i32
    %2 = arith.minsi %1, %c0_i32 : i32
    %c0_i32_0 = arith.constant 0 : i32
    %c0_i32_1 = arith.constant 0 : i32
    return %2, %c0_i32_0 : i32, i32
  }
  func.func @transform_2(%arg0: i32, %arg1: i32) -> (i32, i32) {
    %c0_i32 = arith.constant 0 : i32
    %c0_i32_0 = arith.constant 0 : i32
    return %arg0, %c0_i32 : i32, i32
  }
}

</mosaic_0001>

<llo_original>
// kernel: tpu_custom_call.1
$region0: #{tpu_custom_call.1}
  #allocation0 [shape = 'u32[]', space=smem, size = 0x4, offset = 0x4, fixed_abs, tag = 'smem constant byte address 0x4 - core index']
  #allocation1 [shape = 'u32[144,128]{1,0:T(1,128)}', space=vmem, size = 0x12000, scoped, tag = 'internal scratch']
  %s0 = inlined_call_operand.hbm [shape: f32[16,128], index: 0, kind: input, shape index: {}]
  %s1 = inlined_call_operand.hbm [shape: f32[16,128], index: 1, kind: input, shape index: {}]
  %s2 = inlined_call_operand.hbm [shape: f32[8,128], index: 2, kind: output, shape index: {}]
  %s3 = sld [smem:[#allocation0]]
  $region34: #{tpu_custom_call.1} parent=0
    _
  %s5 = ssub.s32 1, %s3
  %s6 = scalar_select 0, %s5, %s3
  $region1: #{tpu_custom_call.1} parent=0
    #allocation2 [shape = 'u8[8192]{0}', space=vmem, size = 0x2000, scoped, tag = 'input window, operand 0, single buffered']
    #allocation3 [shape = 's32[1]{0}', space=sflag, size = 0x4, scoped, tag = 'scoped memory for tpu_custom_call.1']
    #allocation4 [shape = 's32[1]{0}', space=sflag, size = 0x4, scoped, tag = 'scoped memory for tpu_custom_call.1']
    #allocation5 [shape = 'u8[8192]{0}', space=vmem, size = 0x2000, scoped, tag = 'input window, operand 1, single buffered']
    #allocation6 [shape = 's32[1]{0}', space=sflag, size = 0x4, scoped, tag = 'scoped memory for tpu_custom_call.1']
    #allocation7 [shape = 'u8[4096]{0}', space=vmem, size = 0x1000, scoped, tag = 'output window, operand 0, single buffered']
    %7 = vsyncpa [#allocation3], 0
    %8 = vsyncpa [#allocation6], 0
    %9 = vsyncpa [#allocation4], 0
    // Predicated region
    $region2: #{tpu_custom_call.1} parent=1 // pred_check
      _
    $region3: #{tpu_custom_call.1} parent=1 // pred_check_branch
      %11 = sbr.rel (0) target = $region5
    $region4: #{tpu_custom_call.1} parent=1 // pred_region
      %s12 = sadd.s32 0, 0
      %p13 = scmp.lt.s32.totalorder %s12, 0
      %s14 = scalar_select %p13, %s12, 0
      %s15 = smul.u32 2, %s14
      %s17 = ssub.s32 256, 256
      %18 = vsyncadd [#allocation3], %s17
      %s19 = smul.addr %s15, 128
      %s20 = scalar_lea.hbm %s0, %s19
      %s21 = sshll.u32 [#allocation2], 4
      %s22 = int_to_ptr.vmem [resolvable:$true] %s21
      %27 = dma.hbm_to_vmem [thread:$0]  %s20, 256, %s22, [#allocation3], 128, 128, 8
    $region5: #{tpu_custom_call.1} parent=1 // pred_fallthru
      _
    // Predicated region
    $region6: #{tpu_custom_call.1} parent=1 // pred_check
      _
    $region7: #{tpu_custom_call.1} parent=1 // pred_check_branch
      %29 = sbr.rel (0) target = $region9
    $region8: #{tpu_custom_call.1} parent=1 // pred_region
      %s30 = sadd.s32 0, 0
      %p31 = scmp.lt.s32.totalorder %s30, 0
      %s32 = scalar_select %p31, %s30, 0
      %s33 = smul.u32 2, %s32
      %s35 = ssub.s32 256, 256
      %36 = vsyncadd [#allocation6], %s35
      %s37 = smul.addr %s33, 128
      %s38 = scalar_lea.hbm %s1, %s37
      %s39 = sshll.u32 [#allocation5], 4
      %s40 = int_to_ptr.vmem [resolvable:$true] %s39
      %45 = dma.hbm_to_vmem [thread:$0]  %s38, 256, %s40, [#allocation6], 128, 128, 8
    $region9: #{tpu_custom_call.1} parent=1 // pred_fallthru
      _
    // Predicated region
    $region10: #{tpu_custom_call.1} parent=1 // pred_check
      _
    $region11: #{tpu_custom_call.1} parent=1 // pred_check_branch
      %47 = sbr.rel (0) target = $region13
    $region12: #{tpu_custom_call.1} parent=1 // pred_region
      %48 = dma.done [#allocation3], 256
    $region13: #{tpu_custom_call.1} parent=1 // pred_fallthru
      _
    // Predicated region
    $region14: #{tpu_custom_call.1} parent=1 // pred_check
      _
    $region15: #{tpu_custom_call.1} parent=1 // pred_check_branch
      %50 = sbr.rel (0) target = $region17
    $region16: #{tpu_custom_call.1} parent=1 // pred_region
      %51 = dma.done [#allocation6], 256
    $region17: #{tpu_custom_call.1} parent=1 // pred_fallthru
      _
    %s52 = sadd.s32 0, 0
    %p53 = scmp.lt.s32.totalorder %s52, 0
    %s54 = scalar_select %p53, %s52, 0
    %s55 = smul.u32 2, %s54
    %s56 = sadd.s32 0, 0
    %p57 = scmp.lt.s32.totalorder %s56, 0
    %s58 = scalar_select %p57, %s56, 0
    %s59 = smul.u32 2, %s58
    %s60 = sadd.s32 0, 0
    %p61 = scmp.eq.s32.totalorder 0, 0
    // Predicated region
    $region18: #{tpu_custom_call.1} parent=1 // pred_check
      %p62 = pneg %p61
    $region19: #{tpu_custom_call.1} parent=1 // pred_check_branch
      %64 = sbr.rel (%p62) target = $region21
    $region20: #{tpu_custom_call.1} parent=1 // pred_region
      %65 = vst [vmem:[#allocation7] sm:$0xff] 0.0
    $region21: #{tpu_custom_call.1} parent=1 // pred_fallthru
      _
    %p66 = scmp.lt.s32.totalorder %s60, 1
    // Predicated region
    $region22: #{tpu_custom_call.1} parent=1 // pred_check
      %p67 = pneg %p66
    $region23: #{tpu_custom_call.1} parent=1 // pred_check_branch
      %69 = sbr.rel (%p67) target = $region25
    $region24: #{tpu_custom_call.1} parent=1 // pred_region
      %v70 = vld [vmem:[#allocation2] sm:$0xff]
      %v71 = vld [vmem:[#allocation2 + $0x8] sm:$0xff]
      %v72 = vld [vmem:[#allocation5] sm:$0xff]
      %v73 = vld [vmem:[#allocation5 + $0x8] sm:$0xff]
      %v74 = vsub.f32 %v70, %v72
      %v75 = vsub.f32 %v71, %v73
      %v76 = vmul.f32 %v74, %v74
      %v77 = vmul.f32 %v75, %v75
      %v78 = vadd.f32 %v76, 1e-06
      %v79 = vadd.f32 %v77, 1e-06
      %v80 = vrsqrt.pop %v78
      %v81 = vmul.f32 %v78, %v80
      %vm82 = vcmp.eq.f32.partialorder %v78, inf
      %v83 = vsel %vm82, %v78, %v81
      %vm84 = vcmp.eq.f32.partialorder %v78, 0.0
      %v85 = vand.u32 %v78, 2147483648
      %v86 = vsel %vm84, %v85, %v83
      %v87 = vrsqrt.pop %v79
      %v88 = vmul.f32 %v79, %v87
      %vm89 = vcmp.eq.f32.partialorder %v79, inf
      %v90 = vsel %vm89, %v79, %v88
      %vm91 = vcmp.eq.f32.partialorder %v79, 0.0
      %v92 = vand.u32 %v79, 2147483648
      %v93 = vsel %vm91, %v92, %v90
      %v94 = vld [vmem:[#allocation7] sm:$0xff]
      %v95 = vadd.f32 %v86, %v93
      %v96 = vadd.f32 %v94, %v95
      %97 = vst [vmem:[#allocation7] sm:$0xff] %v96
    $region25: #{tpu_custom_call.1} parent=1 // pred_fallthru
      _
    // Predicated region
    $region26: #{tpu_custom_call.1} parent=1 // pred_check
      _
    $region27: #{tpu_custom_call.1} parent=1 // pred_check_branch
      %99 = sbr.rel (0) target = $region29
    $region28: #{tpu_custom_call.1} parent=1 // pred_region
      %s101 = ssub.s32 128, 128
      %102 = vsyncadd [#allocation4], %s101
      %s104 = sshll.u32 [#allocation7], 4
      %s105 = int_to_ptr.vmem [resolvable:$true] %s104
      %107 = dma.vmem_to_hbm [thread:$0]  %s105, 128, %s2, [#allocation4]
    $region29: #{tpu_custom_call.1} parent=1 // pred_fallthru
      _
    // Predicated region
    $region30: #{tpu_custom_call.1} parent=1 // pred_check
      _
    $region31: #{tpu_custom_call.1} parent=1 // pred_check_branch
      %109 = sbr.rel (0) target = $region33
    $region32: #{tpu_custom_call.1} parent=1 // pred_region
      %110 = dma.done [#allocation4], 128
    $region33: #{tpu_custom_call.1} parent=1 // pred_fallthru
      _
    %111 = vsyncpa [#allocation3], 1
    %112 = vsyncpa [#allocation6], 1
    %113 = vsyncpa [#allocation4], 1

</llo_original>
